<compile_context>
chip_gen: v6e
topology: v6e:2x2x1
jax: 0.10.0
libtpu: 0.0.40
codegen_flags: <defaults>
</compile_context>

<pallas_src>
import jax
import jax.numpy as jnp
from jax.experimental import pallas as pl
from jax.experimental.pallas import tpu as pltpu

INPUT_DIM = 300
HIDDEN_DIM = 512     # the module hardcodes 512 (self.hidden_dim=256 is unused by the Sequential)
OUT_DIM = 1
TILE_B = 1024        # default batch tile; sweep 512-2048 via the tile_b kwarg


def _round_up(x, m):
    return ((x + m - 1) // m) * m


def _choose_tile_b(batch, requested):
    # Small-batch clamp: never tile past round_up(B, 8) (sublane granularity).
    t = max(8, min(requested, _round_up(batch, 8)))
    # For bigger batches, prefer >= 2 balanced tiles so the "parallel" batch axis can be
    # sharded across v7x's two TensorCores.
    if batch > 256:
        t = min(t, max(256, _round_up(-(-batch // 2), 256)))
    return t


def mlp_kernel(x_ref, w1_ref, b1_ref, w2_ref, b2_ref, o_ref):
    # Dropout(0.7) / Dropout(0.9) are identity in eval mode.
    # TODO(synk): training-mode dropout (pltpu.prng_seed + pltpu.stateful_bernoulli masks
    # with 1/(1-p) scaling) is not implemented here.
    x = x_ref[...].astype(jnp.bfloat16)     # (tile_b, 300): streamed f32, bf16 cast on VPU
    w1 = w1_ref[...]                        # (300, 512) bf16, VMEM-resident

    # Linear(300, 512): bf16 operands, f32 accumulation on the MXU (Mosaic handles K=300).
    h = jnp.dot(x, w1, preferred_element_type=jnp.float32)      # (tile_b, 512) f32
    h = jnp.maximum(h + b1_ref[...], 0.0)                       # bias + ReLU on the VPU

    # Linear(512, 1) as a VPU multiply + lane (XLU) reduction; keepdims keeps the result
    # sublane-major so it stores straight into the (tile_b, 1) output block (no relayout).
    s = jnp.sum(h * w2_ref[...], axis=-1, keepdims=True)        # (tile_b, 1) f32
    o_ref[...] = (s + b2_ref[0, 0]).astype(o_ref.dtype)


def overfit_model_forward(x, w1, b1, w2, b2, *, tile_b=TILE_B):
    """x: (B, 300) f32 -> (B, 1) f32. Eval-mode forward of OverfitModel."""
    B = x.shape[0]
    tile_b = _choose_tile_b(B, tile_b)
    num_tiles = -(-B // tile_b)

    # Only the small, one-time weight/bias casts happen in the wrapper; x is streamed
    # untouched (no pad / cast pass over the batch).
    w1_c = w1.astype(jnp.bfloat16)                        # (300, 512), resident
    b1_r = b1.reshape(1, HIDDEN_DIM).astype(jnp.float32)
    w2_r = w2.reshape(1, HIDDEN_DIM).astype(jnp.float32)
    b2_s = b2.reshape(1, 1).astype(jnp.float32)

    # Honest VMEM bound: double-buffered x / out tiles, resident weights, f32 intermediates.
    est_vmem = (2 * tile_b * 384 * 4            # x tiles (f32, 300 lanes padded to 384)
                + 2 * 304 * HIDDEN_DIM * 2      # W1 bf16 (sublanes padded to 304)
                + 3 * tile_b * HIDDEN_DIM * 4   # h / h*w2 f32 intermediates
                + 2 * tile_b * 128 * 4)         # (tile_b, 1) out tiles (lane-padded)
    vmem_limit = int(min(32 * 2**20, max(16 * 2**20, est_vmem + 4 * 2**20)))

    out = pl.pallas_call(
        mlp_kernel,
        out_shape=jax.ShapeDtypeStruct((B, OUT_DIM), jnp.float32),
        grid_spec=pltpu.PrefetchScalarGridSpec(
            num_scalar_prefetch=0,
            grid=(num_tiles,),
            in_specs=[
                pl.BlockSpec((tile_b, INPUT_DIM), lambda i: (i, 0)),      # x (streamed)
                pl.BlockSpec((INPUT_DIM, HIDDEN_DIM), lambda i: (0, 0)),  # W1 (resident)
                pl.BlockSpec((1, HIDDEN_DIM), lambda i: (0, 0)),          # b1 (resident)
                pl.BlockSpec((1, HIDDEN_DIM), lambda i: (0, 0)),          # w2 row (resident)
                pl.BlockSpec(memory_space=pltpu.MemorySpace.SMEM),        # b2 scalar
            ],
            out_specs=pl.BlockSpec((tile_b, OUT_DIM), lambda i: (i, 0)),  # sublane-major rows
        ),
        compiler_params=pltpu.CompilerParams(
            dimension_semantics=("parallel",),   # shard batch tiles across TCs on v7x
            vmem_limit_bytes=vmem_limit,
        ),
        cost_estimate=pl.CostEstimate(
            flops=2 * B * INPUT_DIM * HIDDEN_DIM + 3 * B * HIDDEN_DIM,
            transcendentals=0,
            bytes_accessed=(x.size * 4 + w1_c.size * 2
                            + (b1_r.size + w2_r.size + b2_s.size) * 4
                            + B * OUT_DIM * 4),
        ),
    )(x, w1_c, b1_r, w2_r, b2_s)

    return out


def init_params(key):
    """Deterministic params matching nn.Linear shapes (stored transposed: (in, out))."""
    k1, k2, k3, k4 = jax.random.split(key, 4)
    lim1 = 1.0 / jnp.sqrt(jnp.float32(INPUT_DIM))
    lim2 = 1.0 / jnp.sqrt(jnp.float32(HIDDEN_DIM))
    w1 = jax.random.uniform(k1, (INPUT_DIM, HIDDEN_DIM), jnp.float32, -lim1, lim1)
    b1 = jax.random.uniform(k2, (1, HIDDEN_DIM), jnp.float32, -lim1, lim1)
    w2 = jax.random.uniform(k3, (HIDDEN_DIM, OUT_DIM), jnp.float32, -lim2, lim2)
    b2 = jax.random.uniform(k4, (1, OUT_DIM), jnp.float32, -lim2, lim2)
    return w1, b1, w2, b2


if __name__ == "__main__":
    key = jax.random.PRNGKey(0)
    kx, kp = jax.random.split(key)

    batch = 8
    x = jax.random.normal(kx, (batch, INPUT_DIM), jnp.float32)
    w1, b1, w2, b2 = init_params(kp)

    out = overfit_model_forward(x, w1, b1, w2, b2)
    out = jax.block_until_ready(out)

    # Pure-JAX reference using the same bf16 rounding of x / W1 the kernel uses on the MXU.
    xb = x.astype(jnp.bfloat16).astype(jnp.float32)
    w1b = w1.astype(jnp.bfloat16).astype(jnp.float32)
    ref = jnp.maximum(xb @ w1b + b1, 0.0) @ w2 + b2

    assert out.shape == (batch, OUT_DIM)
    assert jnp.allclose(out, ref, atol=2e-3, rtol=2e-3), float(jnp.max(jnp.abs(out - ref)))

    print("KERNEL_OK")
</pallas_src>

<mosaic_0001>
module attributes {stable_mosaic.version = 11 : i64} {
  func.func @mlp_kernel(%arg0: i32, %arg1: memref<8x300xf32, #tpu.memory_space<vmem>>, %arg2: memref<300x512xbf16, #tpu.memory_space<vmem>>, %arg3: memref<1x512xf32, #tpu.memory_space<vmem>>, %arg4: memref<1x512xf32, #tpu.memory_space<vmem>>, %arg5: memref<1x1xf32, #tpu.memory_space<smem>>, %arg6: memref<8x1xf32, #tpu.memory_space<vmem>>) attributes {dimension_semantics = [#tpu.dimension_semantics<parallel>], iteration_bounds = array<i64: 1>, scalar_prefetch = 0 : i64, scratch_operands = 0 : i64, tpu.core_type = #tpu.core_type<tc>, window_params = [{transform_indices = @transform_0, window_bounds = array<i64: 8, 300>}, {pipeline_mode = #tpu.pipeline_mode<synchronous>, transform_indices = @transform_1, window_bounds = array<i64: 300, 512>}, {pipeline_mode = #tpu.pipeline_mode<synchronous>, transform_indices = @transform_2, window_bounds = array<i64: 1, 512>}, {pipeline_mode = #tpu.pipeline_mode<synchronous>, transform_indices = @transform_3, window_bounds = array<i64: 1, 512>}, {transform_indices = @transform_4, window_bounds = array<i64: 1, 1>}, {transform_indices = @transform_5, window_bounds = array<i64: 8, 1>}]} {
    %c0 = arith.constant 0 : index
    %c0_0 = arith.constant 0 : index
    %0 = vector.load %arg1[%c0, %c0_0] : memref<8x300xf32, #tpu.memory_space<vmem>>, vector<8x300xf32>
    %1 = arith.truncf %0 : vector<8x300xf32> to vector<8x300xbf16>
    %c0_1 = arith.constant 0 : index
    %c0_2 = arith.constant 0 : index
    %2 = vector.load %arg2[%c0_1, %c0_2] : memref<300x512xbf16, #tpu.memory_space<vmem>>, vector<300x512xbf16>
    %cst = arith.constant dense<0.000000e+00> : vector<8x512xf32>
    %3 = tpu.matmul %1, %2, %cst {dimension_numbers = #tpu.dot_dimension_numbers<[1], [0], [0], [1], [0, 0, 1, 1], [], []>} : vector<8x300xbf16>, vector<300x512xbf16>, vector<8x512xf32> -> vector<8x512xf32>
    %c0_3 = arith.constant 0 : index
    %c0_4 = arith.constant 0 : index
    %4 = vector.load %arg3[%c0_3, %c0_4] : memref<1x512xf32, #tpu.memory_space<vmem>>, vector<1x512xf32>
    %5 = vector.broadcast %4 : vector<1x512xf32> to vector<8x512xf32>
    %6 = arith.addf %3, %5 : vector<8x512xf32>
    %cst_5 = arith.constant 0.000000e+00 : f32
    %7 = vector.broadcast %cst_5 : f32 to vector<8x512xf32>
    %8 = arith.maximumf %6, %7 : vector<8x512xf32>
    %c0_6 = arith.constant 0 : index
    %c0_7 = arith.constant 0 : index
    %9 = vector.load %arg4[%c0_6, %c0_7] : memref<1x512xf32, #tpu.memory_space<vmem>>, vector<1x512xf32>
    %10 = vector.broadcast %9 : vector<1x512xf32> to vector<8x512xf32>
    %11 = arith.mulf %8, %10 : vector<8x512xf32>
    %cst_8 = arith.constant dense<0.000000e+00> : vector<8xf32>
    %12 = vector.multi_reduction <add>, %11, %cst_8 [1] : vector<8x512xf32> to vector<8xf32>
    %13 = vector.shape_cast %12 : vector<8xf32> to vector<8x1xf32>
    %c0_9 = arith.constant 0 : index
    %c0_10 = arith.constant 0 : index
    %14 = memref.load %arg5[%c0_9, %c0_10] : memref<1x1xf32, #tpu.memory_space<smem>>
    %15 = vector.broadcast %14 : f32 to vector<8x1xf32>
    %16 = arith.addf %13, %15 : vector<8x1xf32>
    %c0_11 = arith.constant 0 : index
    %c0_12 = arith.constant 0 : index
    %17 = vector.load %arg6[%c0_11, %c0_12] : memref<8x1xf32, #tpu.memory_space<vmem>>, vector<8x1xf32>
    tpu.vector_store %arg6[%c0_11, %c0_12], %16 {strides = array<i32>} : memref<8x1xf32, #tpu.memory_space<vmem>>, vector<8x1xf32>,
    return
  }
  func.func @transform_0(%arg0: i32) -> (i32, i32) {
    %c0_i32 = arith.constant 0 : i32
    %c0_i32_0 = arith.constant 0 : i32
    return %arg0, %c0_i32 : i32, i32
  }
  func.func @transform_1(%arg0: i32) -> (i32, i32) {
    %c0_i32 = arith.constant 0 : i32
    %c0_i32_0 = arith.constant 0 : i32
    %c0_i32_1 = arith.constant 0 : i32
    return %c0_i32, %c0_i32_0 : i32, i32
  }
  func.func @transform_2(%arg0: i32) -> (i32, i32) {
    %c0_i32 = arith.constant 0 : i32
    %c0_i32_0 = arith.constant 0 : i32
    %c0_i32_1 = arith.constant 0 : i32
    return %c0_i32, %c0_i32_0 : i32, i32
  }
  func.func @transform_3(%arg0: i32) -> (i32, i32) {
    %c0_i32 = arith.constant 0 : i32
    %c0_i32_0 = arith.constant 0 : i32
    %c0_i32_1 = arith.constant 0 : i32
    return %c0_i32, %c0_i32_0 : i32, i32
  }
  func.func @transform_4(%arg0: i32) -> (i32, i32) {
    %c0_i32 = arith.constant 0 : i32
    %c0_i32_0 = arith.constant 0 : i32
    %c0_i32_1 = arith.constant 0 : i32
    return %c0_i32, %c0_i32_0 : i32, i32
  }
  func.func @transform_5(%arg0: i32) -> (i32, i32) {
    %c0_i32 = arith.constant 0 : i32
    %c0_i32_0 = arith.constant 0 : i32
    return %arg0, %c0_i32 : i32, i32
  }
}

</mosaic_0001>

<llo_original>
// kernel: tpu_custom_call.1
$region0: #{tpu_custom_call.1}
  #allocation0 [shape = 'u32[]', space=smem, size = 0x4, offset = 0x4, fixed_abs, tag = 'smem constant byte address 0x4 - core index']
  #allocation1 [shape = 'u32[144,128]{1,0:T(1,128)}', space=vmem, size = 0x12000, scoped, tag = 'internal scratch']
  #allocation2 [shape = 'f32[1,1]{1,0:T(1,128)S(6)}', space=smem, size = 0x200, scoped, tag = 'scoped memory for tpu_custom_call.1']
  %s0 = inlined_call_operand.hbm [shape: f32[8,300], index: 0, kind: input, shape index: {}]
  %s1 = inlined_call_operand.hbm [shape: bf16[300,512], index: 1, kind: input, shape index: {}]
  %s2 = inlined_call_operand.vmem [shape: f32[1,512], index: 2, kind: input, shape index: {}]
  %s3 = inlined_call_operand.hbm [shape: f32[1,512], index: 3, kind: input, shape index: {}]
  %s4 = inlined_call_operand.<no memory space> [shape: f32[1,1], index: 4, kind: input, shape index: {}]
  %s5 = inlined_call_operand.vmem [shape: f32[8,1], index: 5, kind: output, shape index: {}]
  %s6 = sld [smem:[#allocation0]]
  $region42: #{tpu_custom_call.1} parent=0
    _
  %s8 = ssub.s32 1, %s6
  %s9 = scalar_select 0, %s8, %s6
  %10 = sst [smem:[#allocation2]] %s4
  $region1: #{tpu_custom_call.1} parent=0
    #allocation3 [shape = 'u8[12288]{0}', space=vmem, size = 0x3000, scoped, tag = 'input window, operand 0, single buffered']
    #allocation4 [shape = 's32[1]{0}', space=sflag, size = 0x4, scoped, tag = 'scoped memory for tpu_custom_call.1']
    #allocation5 [shape = 'u8[311296]{0}', space=vmem, size = 0x4c000, scoped, tag = 'input window, operand 1, single buffered']
    #allocation6 [shape = 's32[1]{0}', space=sflag, size = 0x4, scoped, tag = 'scoped memory for tpu_custom_call.1']
    #allocation7 [shape = 'u8[2048]{0}', space=vmem, size = 0x800, scoped, tag = 'input window, operand 3, single buffered']
    %11 = vsyncpa [#allocation4], 0
    %12 = vsyncpa [#allocation6], 0
    // Predicated region
    $region2: #{tpu_custom_call.1} parent=1 // pred_check
      _
    $region3: #{tpu_custom_call.1} parent=1 // pred_check_branch
      %14 = sbr.rel (0) target = $region5
    $region4: #{tpu_custom_call.1} parent=1 // pred_region
      %s16 = ssub.s32 384, 384
      %17 = vsyncadd [#allocation4], %s16
      %s19 = sshll.u32 [#allocation3], 4
      %s20 = int_to_ptr.vmem [resolvable:$true] %s19
      %22 = dma.hbm_to_vmem [thread:$0]  %s0, 384, %s20, [#allocation4]
    $region5: #{tpu_custom_call.1} parent=1 // pred_fallthru
      _
    // Predicated region
    $region6: #{tpu_custom_call.1} parent=1 // pred_check
      _
    $region7: #{tpu_custom_call.1} parent=1 // pred_check_branch
      %24 = sbr.rel (0) target = $region9
    $region8: #{tpu_custom_call.1} parent=1 // pred_region
      %s26 = ssub.s32 9728, 9728
      %27 = vsyncadd [#allocation6], %s26
      %s28 = sshll.u32 [#allocation5], 4
      %s29 = int_to_ptr.vmem [resolvable:$true] %s28
      %34 = dma.hbm_to_vmem [thread:$0]  %s1, 9728, %s29, [#allocation6], 256, 256, 16
    $region9: #{tpu_custom_call.1} parent=1 // pred_fallthru
      _
    // Predicated region
    $region10: #{tpu_custom_call.1} parent=1 // pred_check
      _
    $region11: #{tpu_custom_call.1} parent=1 // pred_check_branch
      %36 = sbr.rel (0) target = $region13
    $region12: #{tpu_custom_call.1} parent=1 // pred_region
      _
    $region13: #{tpu_custom_call.1} parent=1 // pred_fallthru
      _
    // Predicated region
    $region14: #{tpu_custom_call.1} parent=1 // pred_check
      _
    $region15: #{tpu_custom_call.1} parent=1 // pred_check_branch
      %38 = sbr.rel (0) target = $region17
    $region16: #{tpu_custom_call.1} parent=1 // pred_region
      %s40 = ssub.s32 64, 64
      %41 = vsyncadd [#allocation6], %s40
      %s43 = sshll.u32 [#allocation7], 4
      %s44 = int_to_ptr.vmem [resolvable:$true] %s43
      %46 = dma.hbm_to_vmem [thread:$0]  %s3, 64, %s44, [#allocation6]
    $region17: #{tpu_custom_call.1} parent=1 // pred_fallthru
      _
    // Predicated region
    $region18: #{tpu_custom_call.1} parent=1 // pred_check
      _
    $region19: #{tpu_custom_call.1} parent=1 // pred_check_branch
      %48 = sbr.rel (0) target = $region21
    $region20: #{tpu_custom_call.1} parent=1 // pred_region
      _
    $region21: #{tpu_custom_call.1} parent=1 // pred_fallthru
      _
    // Predicated region
    $region22: #{tpu_custom_call.1} parent=1 // pred_check
      _
    $region23: #{tpu_custom_call.1} parent=1 // pred_check_branch
      %50 = sbr.rel (0) target = $region25
    $region24: #{tpu_custom_call.1} parent=1 // pred_region
      %51 = dma.done [#allocation4], 384
    $region25: #{tpu_custom_call.1} parent=1 // pred_fallthru
      _
    // Predicated region
    $region26: #{tpu_custom_call.1} parent=1 // pred_check
      _
    $region27: #{tpu_custom_call.1} parent=1 // pred_check_branch
      %53 = sbr.rel (0) target = $region29
    $region28: #{tpu_custom_call.1} parent=1 // pred_region
      %54 = dma.done [#allocation6], 9728
    $region29: #{tpu_custom_call.1} parent=1 // pred_fallthru
      _
    // Predicated region
    $region30: #{tpu_custom_call.1} parent=1 // pred_check
      _
    $region31: #{tpu_custom_call.1} parent=1 // pred_check_branch
      %56 = sbr.rel (0) target = $region33
    $region32: #{tpu_custom_call.1} parent=1 // pred_region
      %57 = dma.done [#allocation6], 64
    $region33: #{tpu_custom_call.1} parent=1 // pred_fallthru
      _
    %v59 = vld [vmem:[#allocation3] sm:$0xff]
    %v60 = vld [vmem:[#allocation3 + $0x8] sm:$0xff]
    %v61 = vld [vmem:[#allocation3 + $0x10] sm:$0xff]
    %v62 = vpack.c.bf16 %v59, %v59
    %v63 = vpack.c.bf16 %v60, %v60
    %v64 = vpack.c.bf16 %v61, %v61
    %v65 = vld [vmem:[#allocation5] sm:$0xff]
    %v66 = vld [vmem:[#allocation5 + $0x8] sm:$0xff]
    %v67 = vld [vmem:[#allocation5 + $0x10] sm:$0xff]
    %v68 = vld [vmem:[#allocation5 + $0x18] sm:$0xff]
    %v69 = vld [vmem:[#allocation5 + $0x20] sm:$0xff]
    %v70 = vld [vmem:[#allocation5 + $0x28] sm:$0xff]
    %v71 = vld [vmem:[#allocation5 + $0x30] sm:$0xff]
    %v72 = vld [vmem:[#allocation5 + $0x38] sm:$0xff]
    %v73 = vld [vmem:[#allocation5 + $0x40] sm:$0xff]
    %v74 = vld [vmem:[#allocation5 + $0x48] sm:$0xff]
    %v75 = vld [vmem:[#allocation5 + $0x50] sm:$0xff]
    %v76 = vld [vmem:[#allocation5 + $0x58] sm:$0xff]
    %v77 = vld [vmem:[#allocation5 + $0x60] sm:$0xff]
    %v78 = vld [vmem:[#allocation5 + $0x68] sm:$0xff]
    %v79 = vld [vmem:[#allocation5 + $0x70] sm:$0xff]
    %v80 = vld [vmem:[#allocation5 + $0x78] sm:$0xff]
    %v81 = vld [vmem:[#allocation5 + $0x80] sm:$0xff]
    %v82 = vld [vmem:[#allocation5 + $0x88] sm:$0xff]
    %v83 = vld [vmem:[#allocation5 + $0x90] sm:$0xff]
    %v84 = vld [vmem:[#allocation5 + $0x98] sm:$0xff]
    %v85 = vld [vmem:[#allocation5 + $0xa0] sm:$0xff]
    %v86 = vld [vmem:[#allocation5 + $0xa8] sm:$0xff]
    %v87 = vld [vmem:[#allocation5 + $0xb0] sm:$0xff]
    %v88 = vld [vmem:[#allocation5 + $0xb8] sm:$0xff]
    %v89 = vld [vmem:[#allocation5 + $0xc0] sm:$0xff]
    %v90 = vld [vmem:[#allocation5 + $0xc8] sm:$0xff]
    %v91 = vld [vmem:[#allocation5 + $0xd0] sm:$0xff]
    %v92 = vld [vmem:[#allocation5 + $0xd8] sm:$0xff]
    %v93 = vld [vmem:[#allocation5 + $0xe0] sm:$0xff]
    %v94 = vld [vmem:[#allocation5 + $0xe8] sm:$0xff]
    %v95 = vld [vmem:[#allocation5 + $0xf0] sm:$0xff]
    %v96 = vld [vmem:[#allocation5 + $0xf8] sm:$0xff]
    %v97 = vld [vmem:[#allocation5 + $0x100] sm:$0xff]
    %v98 = vld [vmem:[#allocation5 + $0x108] sm:$0xff]
    %v99 = vld [vmem:[#allocation5 + $0x110] sm:$0xff]
    %v100 = vld [vmem:[#allocation5 + $0x118] sm:$0xff]
    %v101 = vld [vmem:[#allocation5 + $0x120] sm:$0xff]
    %v102 = vld [vmem:[#allocation5 + $0x128] sm:$0xff]
    %v103 = vld [vmem:[#allocation5 + $0x130] sm:$0xff]
    %v104 = vld [vmem:[#allocation5 + $0x138] sm:$0xff]
    %v105 = vld [vmem:[#allocation5 + $0x140] sm:$0xff]
    %v106 = vld [vmem:[#allocation5 + $0x148] sm:$0xff]
    %v107 = vld [vmem:[#allocation5 + $0x150] sm:$0xff]
    %v108 = vld [vmem:[#allocation5 + $0x158] sm:$0xff]
    %v109 = vld [vmem:[#allocation5 + $0x160] sm:$0xff]
    %v110 = vld [vmem:[#allocation5 + $0x168] sm:$0xff]
    %v111 = vld [vmem:[#allocation5 + $0x170] sm:$0xff]
    %v112 = vld [vmem:[#allocation5 + $0x178] sm:$0xff]
    %v113 = vld [vmem:[#allocation5 + $0x180] sm:$0xff]
    %v114 = vld [vmem:[#allocation5 + $0x188] sm:$0xff]
    %v115 = vld [vmem:[#allocation5 + $0x190] sm:$0xff]
    %v116 = vld [vmem:[#allocation5 + $0x198] sm:$0xff]
    %v117 = vld [vmem:[#allocation5 + $0x1a0] sm:$0xff]
    %v118 = vld [vmem:[#allocation5 + $0x1a8] sm:$0xff]
    %v119 = vld [vmem:[#allocation5 + $0x1b0] sm:$0xff]
    %v120 = vld [vmem:[#allocation5 + $0x1b8] sm:$0xff]
    %v121 = vld [vmem:[#allocation5 + $0x1c0] sm:$0xff]
    %v122 = vld [vmem:[#allocation5 + $0x1c8] sm:$0xff]
    %v123 = vld [vmem:[#allocation5 + $0x1d0] sm:$0xff]
    %v124 = vld [vmem:[#allocation5 + $0x1d8] sm:$0xff]
    %v125 = vld [vmem:[#allocation5 + $0x1e0] sm:$0xff]
    %v126 = vld [vmem:[#allocation5 + $0x1e8] sm:$0xff]
    %v127 = vld [vmem:[#allocation5 + $0x1f0] sm:$0xff]
    %v128 = vld [vmem:[#allocation5 + $0x1f8] sm:$0xff]
    %v129 = vld [vmem:[#allocation5 + $0x200] sm:$0xff]
    %v130 = vld [vmem:[#allocation5 + $0x208] sm:$0xff]
    %v131 = vld [vmem:[#allocation5 + $0x210] sm:$0xff]
    %v132 = vld [vmem:[#allocation5 + $0x218] sm:$0xff]
    %v133 = vld [vmem:[#allocation5 + $0x220] sm:$0xff]
    %v134 = vld [vmem:[#allocation5 + $0x228] sm:$0xff]
    %v135 = vld [vmem:[#allocation5 + $0x230] sm:$0xff]
    %v136 = vld [vmem:[#allocation5 + $0x238] sm:$0xff]
    %v137 = vld [vmem:[#allocation5 + $0x240] sm:$0xff]
    %v138 = vld [vmem:[#allocation5 + $0x248] sm:$0xff]
    %v139 = vld [vmem:[#allocation5 + $0x250] sm:$0x33]
    %v140 = vld [vmem:[#allocation5 + $0x258] sm:$0x33]
    %v141 = vld [vmem:[%s2] sm:$0xf]
    %v143 = vlaneseq
    %v144 = vshrl.u32 %v143, 7
    %v145 = vsub.s32 0, %v144
    %v146 = vrot.slane %v141, %v145
    %v147 = vlaneseq
    %v148 = vshrl.u32 %v147, 7
    %v149 = vsub.s32 1, %v148
    %v150 = vrot.slane %v141, %v149
    %v151 = vlaneseq
    %v152 = vshrl.u32 %v151, 7
    %v153 = vsub.s32 2, %v152
    %v154 = vrot.slane %v141, %v153
    %v155 = vlaneseq
    %v156 = vshrl.u32 %v155, 7
    %v157 = vsub.s32 3, %v156
    %v158 = vrot.slane %v141, %v157
    %v239 = vunpack.c.l.b16 %v65
    %v240 = vunpack.c.h.b16 %v65
    %v241 = vunpack.c.l.b16 %v66
    %v242 = vunpack.c.h.b16 %v66
    %v243 = vunpack.c.l.b16 %v67
    %v244 = vunpack.c.h.b16 %v67
    %v245 = vunpack.c.l.b16 %v68
    %v246 = vunpack.c.h.b16 %v68
    %v247 = vunpack.c.l.b16 %v69
    %v248 = vunpack.c.h.b16 %v69
    %v249 = vunpack.c.l.b16 %v70
    %v250 = vunpack.c.h.b16 %v70
    %v251 = vunpack.c.l.b16 %v71
    %v252 = vunpack.c.h.b16 %v71
    %v253 = vunpack.c.l.b16 %v72
    %v254 = vunpack.c.h.b16 %v72
    %v255 = vunpack.c.l.b16 %v73
    %v256 = vunpack.c.h.b16 %v73
    %v257 = vunpack.c.l.b16 %v74
    %v258 = vunpack.c.h.b16 %v74
    %v259 = vunpack.c.l.b16 %v75
    %v260 = vunpack.c.h.b16 %v75
    %v261 = vunpack.c.l.b16 %v76
    %v262 = vunpack.c.h.b16 %v76
    %v263 = vunpack.c.l.b16 %v77
    %v264 = vunpack.c.h.b16 %v77
    %v265 = vunpack.c.l.b16 %v78
    %v266 = vunpack.c.h.b16 %v78
    %v267 = vunpack.c.l.b16 %v79
    %v268 = vunpack.c.h.b16 %v79
    %v269 = vunpack.c.l.b16 %v80
    %v270 = vunpack.c.h.b16 %v80
    %v271 = vunpack.c.l.b16 %v81
    %v272 = vunpack.c.h.b16 %v81
    %v273 = vunpack.c.l.b16 %v82
    %v274 = vunpack.c.h.b16 %v82
    %v275 = vunpack.c.l.b16 %v83
    %v276 = vunpack.c.h.b16 %v83
    %v277 = vunpack.c.l.b16 %v84
    %v278 = vunpack.c.h.b16 %v84
    %v279 = vunpack.c.l.b16 %v85
    %v280 = vunpack.c.h.b16 %v85
    %v281 = vunpack.c.l.b16 %v86
    %v282 = vunpack.c.h.b16 %v86
    %v283 = vunpack.c.l.b16 %v87
    %v284 = vunpack.c.h.b16 %v87
    %v285 = vunpack.c.l.b16 %v88
    %v286 = vunpack.c.h.b16 %v88
    %v287 = vunpack.c.l.b16 %v89
    %v288 = vunpack.c.h.b16 %v89
    %v289 = vunpack.c.l.b16 %v90
    %v290 = vunpack.c.h.b16 %v90
    %v291 = vunpack.c.l.b16 %v91
    %v292 = vunpack.c.h.b16 %v91
    %v293 = vunpack.c.l.b16 %v92
    %v294 = vunpack.c.h.b16 %v92
    %v295 = vunpack.c.l.b16 %v93
    %v296 = vunpack.c.h.b16 %v93
    %v297 = vunpack.c.l.b16 %v94
    %v298 = vunpack.c.h.b16 %v94
    %v299 = vunpack.c.l.b16 %v95
    %v300 = vunpack.c.h.b16 %v95
    %v301 = vunpack.c.l.b16 %v96
    %v302 = vunpack.c.h.b16 %v96
    %v303 = vunpack.c.l.b16 %v97
    %v304 = vunpack.c.h.b16 %v97
    %v305 = vunpack.c.l.b16 %v98
    %v306 = vunpack.c.h.b16 %v98
    %v307 = vunpack.c.l.b16 %v99
    %v308 = vunpack.c.h.b16 %v99
    %v309 = vunpack.c.l.b16 %v100
    %v310 = vunpack.c.h.b16 %v100
    %v311 = vunpack.c.l.b16 %v101
    %v312 = vunpack.c.h.b16 %v101
    %v313 = vunpack.c.l.b16 %v102
    %v314 = vunpack.c.h.b16 %v102
    %v315 = vunpack.c.l.b16 %v103
    %v316 = vunpack.c.h.b16 %v103
    %v317 = vunpack.c.l.b16 %v104
    %v318 = vunpack.c.h.b16 %v104
    %v319 = vunpack.c.l.b16 %v105
    %v320 = vunpack.c.h.b16 %v105
    %v321 = vunpack.c.l.b16 %v106
    %v322 = vunpack.c.h.b16 %v106
    %v323 = vunpack.c.l.b16 %v107
    %v324 = vunpack.c.h.b16 %v107
    %v325 = vunpack.c.l.b16 %v108
    %v326 = vunpack.c.h.b16 %v108
    %v327 = vunpack.c.l.b16 %v109
    %v328 = vunpack.c.h.b16 %v109
    %v329 = vunpack.c.l.b16 %v110
    %v330 = vunpack.c.h.b16 %v110
    %v331 = vunpack.c.l.b16 %v111
    %v332 = vunpack.c.h.b16 %v111
    %v333 = vunpack.c.l.b16 %v112
    %v334 = vunpack.c.h.b16 %v112
    %v335 = vunpack.c.l.b16 %v113
    %v336 = vunpack.c.h.b16 %v113
    %v337 = vunpack.c.l.b16 %v114
    %v338 = vunpack.c.h.b16 %v114
    %v339 = vunpack.c.l.b16 %v115
    %v340 = vunpack.c.h.b16 %v115
    %v341 = vunpack.c.l.b16 %v116
    %v342 = vunpack.c.h.b16 %v116
    %v343 = vunpack.c.l.b16 %v117
    %v344 = vunpack.c.h.b16 %v117
    %v345 = vunpack.c.l.b16 %v118
    %v346 = vunpack.c.h.b16 %v118
    %v347 = vunpack.c.l.b16 %v119
    %v348 = vunpack.c.h.b16 %v119
    %v349 = vunpack.c.l.b16 %v120
    %v350 = vunpack.c.h.b16 %v120
    %v351 = vunpack.c.l.b16 %v121
    %v352 = vunpack.c.h.b16 %v121
    %v353 = vunpack.c.l.b16 %v122
    %v354 = vunpack.c.h.b16 %v122
    %v355 = vunpack.c.l.b16 %v123
    %v356 = vunpack.c.h.b16 %v123
    %v357 = vunpack.c.l.b16 %v124
    %v358 = vunpack.c.h.b16 %v124
    %v359 = vunpack.c.l.b16 %v125
    %v360 = vunpack.c.h.b16 %v125
    %v361 = vunpack.c.l.b16 %v126
    %v362 = vunpack.c.h.b16 %v126
    %v363 = vunpack.c.l.b16 %v127
    %v364 = vunpack.c.h.b16 %v127
    %v365 = vunpack.c.l.b16 %v128
    %v366 = vunpack.c.h.b16 %v128
    %v367 = vunpack.c.l.b16 %v129
    %v368 = vunpack.c.h.b16 %v129
    %v369 = vunpack.c.l.b16 %v130
    %v370 = vunpack.c.h.b16 %v130
    %v371 = vunpack.c.l.b16 %v131
    %v372 = vunpack.c.h.b16 %v131
    %v373 = vunpack.c.l.b16 %v132
    %v374 = vunpack.c.h.b16 %v132
    %v375 = vunpack.c.l.b16 %v133
    %v376 = vunpack.c.h.b16 %v133
    %v377 = vunpack.c.l.b16 %v134
    %v378 = vunpack.c.h.b16 %v134
    %v379 = vunpack.c.l.b16 %v135
    %v380 = vunpack.c.h.b16 %v135
    %v381 = vunpack.c.l.b16 %v136
    %v382 = vunpack.c.h.b16 %v136
    %v383 = vunpack.c.l.b16 %v137
    %v384 = vunpack.c.h.b16 %v137
    %v385 = vunpack.c.l.b16 %v138
    %v386 = vunpack.c.h.b16 %v138
    %v387 = vunpack.c.l.b16 %v139
    %v388 = vunpack.c.h.b16 %v139
    %v389 = vunpack.c.l.b16 %v140
    %v390 = vunpack.c.h.b16 %v140
    %v391 = vpack.c.b16 %v243, %v239
    %v392 = vpack.c.b16 %v244, %v240
    %v393 = vpack.c.b16 %v245, %v241
    %v394 = vpack.c.b16 %v246, %v242
    %v395 = vpack.c.b16 %v251, %v247
    %v396 = vpack.c.b16 %v252, %v248
    %v397 = vpack.c.b16 %v253, %v249
    %v398 = vpack.c.b16 %v254, %v250
    %v399 = vpack.c.b16 %v259, %v255
    %v400 = vpack.c.b16 %v260, %v256
    %v401 = vpack.c.b16 %v261, %v257
    %v402 = vpack.c.b16 %v262, %v258
    %v403 = vpack.c.b16 %v267, %v263
    %v404 = vpack.c.b16 %v268, %v264
    %v405 = vpack.c.b16 %v269, %v265
    %v406 = vpack.c.b16 %v270, %v266
    %v407 = vpack.c.b16 %v275, %v271
    %v408 = vpack.c.b16 %v276, %v272
    %v409 = vpack.c.b16 %v277, %v273
    %v410 = vpack.c.b16 %v278, %v274
    %v411 = vpack.c.b16 %v283, %v279
    %v412 = vpack.c.b16 %v284, %v280
    %v413 = vpack.c.b16 %v285, %v281
    %v414 = vpack.c.b16 %v286, %v282
    %v415 = vpack.c.b16 %v291, %v287
    %v416 = vpack.c.b16 %v292, %v288
    %v417 = vpack.c.b16 %v293, %v289
    %v418 = vpack.c.b16 %v294, %v290
    %v419 = vpack.c.b16 %v299, %v295
    %v420 = vpack.c.b16 %v300, %v296
    %v421 = vpack.c.b16 %v301, %v297
    %v422 = vpack.c.b16 %v302, %v298
    %v423 = vpack.c.b16 %v307, %v303
    %v424 = vpack.c.b16 %v308, %v304
    %v425 = vpack.c.b16 %v309, %v305
    %v426 = vpack.c.b16 %v310, %v306
    %v427 = vpack.c.b16 %v315, %v311
    %v428 = vpack.c.b16 %v316, %v312
    %v429 = vpack.c.b16 %v317, %v313
    %v430 = vpack.c.b16 %v318, %v314
    %v431 = vpack.c.b16 %v323, %v319
    %v432 = vpack.c.b16 %v324, %v320
    %v433 = vpack.c.b16 %v325, %v321
    %v434 = vpack.c.b16 %v326, %v322
    %v435 = vpack.c.b16 %v331, %v327
    %v436 = vpack.c.b16 %v332, %v328
    %v437 = vpack.c.b16 %v333, %v329
    %v438 = vpack.c.b16 %v334, %v330
    %v439 = vpack.c.b16 %v339, %v335
    %v440 = vpack.c.b16 %v340, %v336
    %v441 = vpack.c.b16 %v341, %v337
    %v442 = vpack.c.b16 %v342, %v338
    %v443 = vpack.c.b16 %v347, %v343
    %v444 = vpack.c.b16 %v348, %v344
    %v445 = vpack.c.b16 %v349, %v345
    %v446 = vpack.c.b16 %v350, %v346
    %v447 = vpack.c.b16 %v355, %v351
    %v448 = vpack.c.b16 %v356, %v352
    %v449 = vpack.c.b16 %v357, %v353
    %v450 = vpack.c.b16 %v358, %v354
    %v451 = vpack.c.b16 %v363, %v359
    %v452 = vpack.c.b16 %v364, %v360
    %v453 = vpack.c.b16 %v365, %v361
    %v454 = vpack.c.b16 %v366, %v362
    %v455 = vpack.c.b16 %v371, %v367
    %v456 = vpack.c.b16 %v372, %v368
    %v457 = vpack.c.b16 %v373, %v369
    %v458 = vpack.c.b16 %v374, %v370
    %v459 = vpack.c.b16 %v379, %v375
    %v460 = vpack.c.b16 %v380, %v376
    %v461 = vpack.c.b16 %v381, %v377
    %v462 = vpack.c.b16 %v382, %v378
    %v463 = vpack.c.b16 %v387, %v383
    %v464 = vpack.c.b16 %v388, %v384
    %v465 = vpack.c.b16 %v389, %v385
    %v466 = vpack.c.b16 %v390, %v386
    %vm539 = vcmask 359424
    %v541 = vsel %vm539, %v64, 0
    %vm543 = vcmask 1045504
    %v545 = vsel %vm543, %v463, 0
    %v548 = vsel %vm543, %v464, 0
    %v551 = vsel %vm543, %v465, 0
    %v554 = vsel %vm543, %v466, 0
    %556 = vmatprep.subr.bf16.mxu0 %v420
    %557 = vmatpush1.bf16.msra.mxu0 %v419
    %558 = vmatprep.subr.bf16.mxu0 %v416
    %559 = vmatpush1.bf16.msra.mxu0 %v415
    %560 = vmatprep.subr.bf16.mxu0 %v412
    %561 = vmatpush1.bf16.msra.mxu0 %v411
    %562 = vmatprep.subr.bf16.mxu0 %v408
    %563 = vmatpush1.bf16.msra.mxu0 %v407
    %564 = vmatprep.subr.bf16.mxu0 %v404
    %565 = vmatpush1.bf16.msra.mxu0 %v403
    %566 = vmatprep.subr.bf16.mxu0 %v400
    %567 = vmatpush1.bf16.msra.mxu0 %v399
    %568 = vmatprep.subr.bf16.mxu0 %v396
    %569 = vmatpush1.bf16.msra.mxu0 %v395
    %570 = vmatprep.subr.bf16.mxu0 %v392
    %571 = vmatpush1.bf16.msra.mxu0 %v391
    %572 = vmatprep.subr.bf16.mxu0 %v452
    %573 = vmatpush2.bf16.msra.mxu0 %v451
    %574 = vmatprep.subr.bf16.mxu0 %v448
    %575 = vmatpush2.bf16.msra.mxu0 %v447
    %576 = vmatprep.subr.bf16.mxu0 %v444
    %577 = vmatpush2.bf16.msra.mxu0 %v443
    %578 = vmatprep.subr.bf16.mxu0 %v440
    %579 = vmatpush2.bf16.msra.mxu0 %v439
    %580 = vmatprep.subr.bf16.mxu0 %v436
    %581 = vmatpush2.bf16.msra.mxu0 %v435
    %582 = vmatprep.subr.bf16.mxu0 %v432
    %583 = vmatpush2.bf16.msra.mxu0 %v431
    %584 = vmatprep.subr.bf16.mxu0 %v428
    %585 = vmatpush2.bf16.msra.mxu0 %v427
    %586 = vmatprep.subr.bf16.mxu0 %v424
    %587 = vmatpush2.bf16.msra.mxu0 %v423
    %588 = vmatprep.mubr.bf16.mxu0 %v63
    %589 = vmatmul.mubr.bf16.gmra.mxu0 %v62
    %v590 = vpop.f32.mrf.mxu0
    %v591 = vadd.f32 %v146, %v590
    %v592 = vpop.f32.mrf.mxu0
    %v593 = vadd.f32 %v150, %v592
    %v594 = vpop.f32.mrf.mxu0
    %v595 = vpop.f32.mrf.mxu0
    %596 = vdwg.mxu0
    %597 = vmatprep.subr.bf16.mxu0 0
    %598 = vmatpush1.bf16.msra.mxu0 0
    %599 = vmatprep.subr.bf16.mxu0 0
    %600 = vmatpush1.bf16.msra.mxu0 0
    %601 = vmatprep.subr.bf16.mxu0 0
    %602 = vmatpush1.bf16.msra.mxu0 0
    %603 = vmatprep.subr.bf16.mxu0 0
    %604 = vmatpush1.bf16.msra.mxu0 0
    %605 = vmatprep.subr.bf16.mxu0 0
    %606 = vmatpush1.bf16.msra.mxu0 0
    %607 = vmatprep.subr.bf16.mxu0 %v548
    %608 = vmatpush1.bf16.msra.mxu0 %v545
    %609 = vmatprep.subr.bf16.mxu0 %v460
    %610 = vmatpush1.bf16.msra.mxu0 %v459
    %611 = vmatprep.subr.bf16.mxu0 %v456
    %612 = vmatpush1.bf16.msra.mxu0 %v455
    %613 = vmatprep.subr.bf16.mxu0 0
    %614 = vmatpush2.bf16.msra.mxu0 0
    %615 = vmatprep.subr.bf16.mxu0 0
    %616 = vmatpush2.bf16.msra.mxu0 0
    %617 = vmatprep.subr.bf16.mxu0 0
    %618 = vmatpush2.bf16.msra.mxu0 0
    %619 = vmatprep.subr.bf16.mxu0 0
    %620 = vmatpush2.bf16.msra.mxu0 0
    %621 = vmatprep.subr.bf16.mxu0 0
    %622 = vmatpush2.bf16.msra.mxu0 0
    %623 = vmatprep.subr.bf16.mxu0 0
    %624 = vmatpush2.bf16.msra.mxu0 0
    %625 = vmatprep.subr.bf16.mxu0 0
    %626 = vmatpush2.bf16.msra.mxu0 0
    %627 = vmatprep.subr.bf16.mxu0 0
    %628 = vmatpush2.bf16.msra.mxu0 0
    %629 = vmatprep.mubr.bf16.mxu0 0
    %630 = vmatmul.mubr.bf16.gmra.mxu0 %v541
    %v631 = vpop.f32.mrf.mxu0
    %v632 = vadd.f32 %v591, %v631
    %v633 = vpop.f32.mrf.mxu0
    %v634 = vadd.f32 %v593, %v633
    %v635 = vpop.f32.mrf.mxu0
    %v636 = vpop.f32.mrf.mxu0
    %637 = vdwg.mxu0
    %638 = vmatprep.subr.bf16.mxu0 %v422
    %639 = vmatpush1.bf16.msra.mxu0 %v421
    %640 = vmatprep.subr.bf16.mxu0 %v418
    %641 = vmatpush1.bf16.msra.mxu0 %v417
    %642 = vmatprep.subr.bf16.mxu0 %v414
    %643 = vmatpush1.bf16.msra.mxu0 %v413
    %644 = vmatprep.subr.bf16.mxu0 %v410
    %645 = vmatpush1.bf16.msra.mxu0 %v409
    %646 = vmatprep.subr.bf16.mxu0 %v406
    %647 = vmatpush1.bf16.msra.mxu0 %v405
    %648 = vmatprep.subr.bf16.mxu0 %v402
    %649 = vmatpush1.bf16.msra.mxu0 %v401
    %650 = vmatprep.subr.bf16.mxu0 %v398
    %651 = vmatpush1.bf16.msra.mxu0 %v397
    %652 = vmatprep.subr.bf16.mxu0 %v394
    %653 = vmatpush1.bf16.msra.mxu0 %v393
    %654 = vmatprep.subr.bf16.mxu0 %v454
    %655 = vmatpush2.bf16.msra.mxu0 %v453
    %656 = vmatprep.subr.bf16.mxu0 %v450
    %657 = vmatpush2.bf16.msra.mxu0 %v449
    %658 = vmatprep.subr.bf16.mxu0 %v446
    %659 = vmatpush2.bf16.msra.mxu0 %v445
    %660 = vmatprep.subr.bf16.mxu0 %v442
    %661 = vmatpush2.bf16.msra.mxu0 %v441
    %662 = vmatprep.subr.bf16.mxu0 %v438
    %663 = vmatpush2.bf16.msra.mxu0 %v437
    %664 = vmatprep.subr.bf16.mxu0 %v434
    %665 = vmatpush2.bf16.msra.mxu0 %v433
    %666 = vmatprep.subr.bf16.mxu0 %v430
    %667 = vmatpush2.bf16.msra.mxu0 %v429
    %668 = vmatprep.subr.bf16.mxu0 %v426
    %669 = vmatpush2.bf16.msra.mxu0 %v425
    %670 = vmatprep.mubr.bf16.mxu0 %v63
    %671 = vmatmul.mubr.bf16.gmra.mxu0 %v62
    %v672 = vpop.f32.mrf.mxu0
    %v673 = vadd.f32 %v154, %v672
    %v674 = vpop.f32.mrf.mxu0
    %v675 = vadd.f32 %v158, %v674
    %v676 = vpop.f32.mrf.mxu0
    %v677 = vpop.f32.mrf.mxu0
    %678 = vdwg.mxu0
    %679 = vmatprep.subr.bf16.mxu0 0
    %680 = vmatpush1.bf16.msra.mxu0 0
    %681 = vmatprep.subr.bf16.mxu0 0
    %682 = vmatpush1.bf16.msra.mxu0 0
    %683 = vmatprep.subr.bf16.mxu0 0
    %684 = vmatpush1.bf16.msra.mxu0 0
    %685 = vmatprep.subr.bf16.mxu0 0
    %686 = vmatpush1.bf16.msra.mxu0 0
    %687 = vmatprep.subr.bf16.mxu0 0
    %688 = vmatpush1.bf16.msra.mxu0 0
    %689 = vmatprep.subr.bf16.mxu0 %v554
    %690 = vmatpush1.bf16.msra.mxu0 %v551
    %691 = vmatprep.subr.bf16.mxu0 %v462
    %692 = vmatpush1.bf16.msra.mxu0 %v461
    %693 = vmatprep.subr.bf16.mxu0 %v458
    %694 = vmatpush1.bf16.msra.mxu0 %v457
    %695 = vmatprep.subr.bf16.mxu0 0
    %696 = vmatpush2.bf16.msra.mxu0 0
    %697 = vmatprep.subr.bf16.mxu0 0
    %698 = vmatpush2.bf16.msra.mxu0 0
    %699 = vmatprep.subr.bf16.mxu0 0
    %700 = vmatpush2.bf16.msra.mxu0 0
    %701 = vmatprep.subr.bf16.mxu0 0
    %702 = vmatpush2.bf16.msra.mxu0 0
    %703 = vmatprep.subr.bf16.mxu0 0
    %704 = vmatpush2.bf16.msra.mxu0 0
    %705 = vmatprep.subr.bf16.mxu0 0
    %706 = vmatpush2.bf16.msra.mxu0 0
    %707 = vmatprep.subr.bf16.mxu0 0
    %708 = vmatpush2.bf16.msra.mxu0 0
    %709 = vmatprep.subr.bf16.mxu0 0
    %710 = vmatpush2.bf16.msra.mxu0 0
    %711 = vmatprep.mubr.bf16.mxu0 0
    %712 = vmatmul.mubr.bf16.gmra.mxu0 %v541
    %v713 = vpop.f32.mrf.mxu0
    %v714 = vadd.f32 %v673, %v713
    %v715 = vpop.f32.mrf.mxu0
    %v716 = vadd.f32 %v675, %v715
    %v717 = vpop.f32.mrf.mxu0
    %v718 = vpop.f32.mrf.mxu0
    %719 = vdwg.mxu0
    %v720 = vmax.f32 %v632, 0.0
    %v721 = vmax.f32 %v634, 0.0
    %v722 = vmax.f32 %v714, 0.0
    %v723 = vmax.f32 %v716, 0.0
    %v724 = vld [vmem:[#allocation7] sm:$0xf]
    %v726 = vlaneseq
    %v727 = vshrl.u32 %v726, 7
    %v728 = vsub.s32 0, %v727
    %v729 = vrot.slane %v724, %v728
    %v730 = vlaneseq
    %v731 = vshrl.u32 %v730, 7
    %v732 = vsub.s32 1, %v731
    %v733 = vrot.slane %v724, %v732
    %v734 = vlaneseq
    %v735 = vshrl.u32 %v734, 7
    %v736 = vsub.s32 2, %v735
    %v737 = vrot.slane %v724, %v736
    %v738 = vlaneseq
    %v739 = vshrl.u32 %v738, 7
    %v740 = vsub.s32 3, %v739
    %v741 = vrot.slane %v724, %v740
    %v746 = vmul.f32 %v720, %v729
    %v747 = vmul.f32 %v721, %v733
    %v748 = vmul.f32 %v722, %v737
    %v749 = vmul.f32 %v723, %v741
    %v750 = vadd.f32 %v746, %v747
    %v751 = vadd.f32 %v750, %v748
    %v752 = vadd.f32 %v751, %v749
    %753 = vadd.xlane.f32.xlu0 %v752
    %v754 = vpop.xlane.xlu0 %753
    %s755 = sld [smem:[#allocation2]]
    %v756 = vstv %s755
    %v757 = vadd.f32 %v754, %v756
    %vm758 = vcmask 7168
    %759 = vst.msk [vmem:[%s5] sm:$0xff] %vm758, %v757
    // Predicated region
    $region34: #{tpu_custom_call.1} parent=1 // pred_check
      _
    $region35: #{tpu_custom_call.1} parent=1 // pred_check_branch
      %761 = sbr.rel (0) target = $region37
    $region36: #{tpu_custom_call.1} parent=1 // pred_region
      _
    $region37: #{tpu_custom_call.1} parent=1 // pred_fallthru
      _
    // Predicated region
    $region38: #{tpu_custom_call.1} parent=1 // pred_check
      _
    $region39: #{tpu_custom_call.1} parent=1 // pred_check_branch
      %763 = sbr.rel (0) target = $region41
    $region40: #{tpu_custom_call.1} parent=1 // pred_region
      _
    $region41: #{tpu_custom_call.1} parent=1 // pred_fallthru
      _
    %764 = vsyncpa [#allocation4], 1
    %765 = vsyncpa [#allocation6], 1

</llo_original>
